<compile_context>
chip_gen: v7x
topology: tpu7x:2x2x1
jax: 0.10.0
libtpu: 0.0.40
codegen_flags: <defaults>
</compile_context>

<pallas_src>
import functools

import jax
import jax.numpy as jnp
from jax.experimental import pallas as pl
from jax.experimental.pallas import tpu as pltpu

LANE = 128
SUB_ROWS = 32            # per-sub-chunk working set ~4 vregs/array -> no spills
MIN_TOTAL_TILES = 4      # v7x has 2 TensorCores; give each >= 2 streaming steps


def _alpha_composite_kernel(src_ref, alpha_ref, out_ref, *, sub_rows=SUB_ROWS):
    # src_ref:   (1, D, C, rows, 128)
    # alpha_ref: (1, D, 1, rows, 128)
    # out_ref:   (1, C, rows, 128)
    depth = src_ref.shape[1]
    n_chan = src_ref.shape[2]
    rows = src_ref.shape[3]
    lanes = src_ref.shape[4]

    def do_chunk(r0, nr):
        sl = pl.ds(r0, nr)
        trans = jnp.ones((nr, lanes), jnp.float32)      # running transmittance (weight_1)
        accs = [jnp.zeros((nr, lanes), jnp.float32) for _ in range(n_chan)]
        # D is small & static -> unrolled sequential cumprod over depth.
        for d in range(depth):
            a = jnp.maximum(alpha_ref[0, d, 0, sl, :].astype(jnp.float32), 0.0001)
            w = trans * a                               # weight_1 * alpha
            for c in range(n_chan):
                accs[c] = accs[c] + w * src_ref[0, d, c, sl, :].astype(jnp.float32)
            if d + 1 < depth:
                trans = trans * (1.0 - a)
        for c in range(n_chan):
            out_ref[0, c, sl, :] = accs[c].astype(out_ref.dtype)

    # Sub-chunk the (possibly large) DMA tile so the accumulators' live ranges
    # end at each chunk's store and never spill, independent of the tile size.
    n_full, rem = divmod(rows, sub_rows)
    for i in range(n_full):
        do_chunk(i * sub_rows, sub_rows)
    if rem:
        do_chunk(n_full * sub_rows, rem)


def _vmem_plan():
    """Generation-aware (block-set budget, scoped-vmem limit) in bytes."""
    mib = 1024 * 1024
    phys = 128 * mib
    kind = ""
    try:
        info = pltpu.get_tpu_info()
        phys = int(getattr(info, "vmem_capacity_bytes", phys) or phys)
    except Exception:
        pass
    try:
        kind = (jax.devices()[0].device_kind or "").lower()
    except Exception:
        pass
    if phys <= 64 * mib or "v7" in kind:
        # v7x: only 64 MiB physical VMEM per TC -- leave compiler headroom.
        return 24 * mib, 48 * mib
    if "v5e" in kind or "v5 lite" in kind or "v5lite" in kind:
        # v5e: modest bump over its 16 MiB scoped default, lowest HBM BW.
        return 12 * mib, 32 * mib
    # v6e and other 128 MiB-VMEM parts.
    return 32 * mib, 64 * mib


def alpha_composition(src_imgs, alpha_imgs, *, max_rows_per_tile=512,
                      input_buffer_count=None):
    """src_imgs: [B, D, 3, H, W], alpha_imgs: [B, D, 1, H, W] -> [B, 3, H, W]."""
    B, D, C, H, W = src_imgs.shape
    assert alpha_imgs.shape == (B, D, 1, H, W)
    P = H * W
    R = pl.cdiv(P, LANE)                    # rows of 128 lanes

    # ---- generation-aware tile sizing (HBM streaming: biggest tile that fits) ----
    budget, vmem_limit = _vmem_plan()
    in_bufs = 2 if input_buffer_count is None else int(input_buffer_count)
    itemsize = jnp.dtype(src_imgs.dtype).itemsize
    # multi-buffered src+alpha blocks + double-buffered output block, per row
    bytes_per_row = (in_bufs * D * (C + 1) + 2 * C) * LANE * itemsize
    cap = min(int(max_rows_per_tile), budget // bytes_per_row)
    cap = max(8, (cap // 8) * 8)

    if R <= cap:
        # Split small grids so the total iteration count is >= MIN_TOTAL_TILES
        # (both v7x TensorCores stream HBM); keep tiles sublane-aligned (>=8 rows).
        want = -(-MIN_TOTAL_TILES // B)
        want = min(want, max(1, R // 8))
        if want <= 1:
            rows = R                        # full-dim block (ok even if R % 8 != 0)
        else:
            per = -(-R // want)
            rows = -(-per // 8) * 8
    else:
        rows = cap
    n_tiles = pl.cdiv(R, rows)              # ragged last tile handled by Pallas masking

    # ---- layout: pixels -> (R, 128) lane-dense slab (pad lanes only if needed) ----
    src_f = src_imgs.reshape(B, D, C, P)
    alp_f = alpha_imgs.reshape(B, D, 1, P)
    P_pad = R * LANE
    if P_pad != P:                           # only when H*W % 128 != 0 (rare)
        pad = [(0, 0)] * 3 + [(0, P_pad - P)]
        src_f = jnp.pad(src_f, pad)
        alp_f = jnp.pad(alp_f, pad)
    src_f = src_f.reshape(B, D, C, R, LANE)
    alp_f = alp_f.reshape(B, D, 1, R, LANE)

    in_kwargs = {}
    if input_buffer_count is not None and int(input_buffer_count) > 2:
        # Optional deeper input pipelining (sweepable); default 2-deep.
        in_kwargs["pipeline_mode"] = pl.Buffered(int(input_buffer_count))

    out = pl.pallas_call(
        functools.partial(_alpha_composite_kernel, sub_rows=SUB_ROWS),
        out_shape=jax.ShapeDtypeStruct((B, C, R, LANE), src_imgs.dtype),
        grid=(B, n_tiles),
        in_specs=[
            pl.BlockSpec((1, D, C, rows, LANE), lambda b, p: (b, 0, 0, p, 0), **in_kwargs),
            pl.BlockSpec((1, D, 1, rows, LANE), lambda b, p: (b, 0, 0, p, 0), **in_kwargs),
        ],
        out_specs=pl.BlockSpec((1, C, rows, LANE), lambda b, p: (b, 0, p, 0)),
        compiler_params=pltpu.CompilerParams(
            dimension_semantics=("parallel", "parallel"),
            vmem_limit_bytes=int(vmem_limit)),
    )(src_f, alp_f)

    out = out.reshape(B, C, P_pad)
    if P_pad != P:
        out = out[:, :, :P]
    return out.reshape(B, C, H, W)


def _reference(src_imgs, alpha_imgs):
    """Pure-JAX reference mirroring the PyTorch forward (default path)."""
    alpha = jnp.maximum(alpha_imgs, 0.0001)
    ones = jnp.ones_like(alpha[:, :1])
    weight_1 = jnp.cumprod(jnp.concatenate([ones, 1.0 - alpha[:, :-1]], axis=1), axis=1)
    return jnp.sum(weight_1 * alpha * src_imgs, axis=1)


if __name__ == "__main__":
    key = jax.random.PRNGKey(0)

    def run_case(B, D, C, H, W, tag):
        k1, k2 = jax.random.split(jax.random.fold_in(key, tag))
        src = jax.random.uniform(k1, (B, D, C, H, W), dtype=jnp.float32)
        alpha = jax.random.uniform(k2, (B, D, 1, H, W), dtype=jnp.float32)
        out = jax.block_until_ready(alpha_composition(src, alpha))
        ref = _reference(src, alpha)
        assert out.shape == (B, C, H, W)
        assert jnp.allclose(out, ref, atol=1e-5, rtol=1e-5), \
            f"mismatch vs reference for shape {(B, D, C, H, W)}"

    # Primary small case (spec-consistent shapes).
    run_case(2, 4, 3, 16, 16, 0)
    # B=1: grid split into multiple row tiles (keeps both v7x TCs busy).
    run_case(1, 4, 3, 64, 64, 1)
    # Ragged last row-tile (masked boundary block, no wrapper pad).
    run_case(1, 4, 3, 72, 64, 2)
    # Lane-padding path (H*W % 128 != 0) and a different depth.
    run_case(2, 3, 3, 10, 10, 3)

    print("KERNEL_OK")
</pallas_src>

<mosaic_0001>
module attributes {stable_mosaic.version = 11 : i64} {
  func.func @_alpha_composite_kernel(%arg0: i32, %arg1: i32, %arg2: memref<1x4x3x2x128xf32, #tpu.memory_space<vmem>>, %arg3: memref<1x4x1x2x128xf32, #tpu.memory_space<vmem>>, %arg4: memref<1x3x2x128xf32, #tpu.memory_space<vmem>>) attributes {dimension_semantics = [#tpu.dimension_semantics<parallel>, #tpu.dimension_semantics<parallel>], iteration_bounds = array<i64: 2, 1>, scalar_prefetch = 0 : i64, scratch_operands = 0 : i64, tpu.core_type = #tpu.core_type<tc>, window_params = [{transform_indices = @transform_0, window_bounds = array<i64: 1, 4, 3, 2, 128>}, {transform_indices = @transform_1, window_bounds = array<i64: 1, 4, 1, 2, 128>}, {transform_indices = @transform_2, window_bounds = array<i64: 1, 3, 2, 128>}]} {
    %cst = arith.constant 1.000000e+00 : f32
    %0 = vector.broadcast %cst : f32 to vector<2x128xf32>
    %cst_0 = arith.constant 0.000000e+00 : f32
    %1 = vector.broadcast %cst_0 : f32 to vector<2x128xf32>
    %cst_1 = arith.constant 0.000000e+00 : f32
    %2 = vector.broadcast %cst_1 : f32 to vector<2x128xf32>
    %cst_2 = arith.constant 0.000000e+00 : f32
    %3 = vector.broadcast %cst_2 : f32 to vector<2x128xf32>
    %c0 = arith.constant 0 : index
    %c0_3 = arith.constant 0 : index
    %c0_4 = arith.constant 0 : index
    %c0_5 = arith.constant 0 : index
    %c0_6 = arith.constant 0 : index
    %4 = vector.load %arg3[%c0, %c0_3, %c0_4, %c0_5, %c0_6] : memref<1x4x1x2x128xf32, #tpu.memory_space<vmem>>, vector<1x1x1x2x128xf32>
    %5 = vector.shape_cast %4 : vector<1x1x1x2x128xf32> to vector<2x128xf32>
    %cst_7 = arith.constant 9.99999974E-5 : f32
    %6 = vector.broadcast %cst_7 : f32 to vector<2x128xf32>
    %7 = arith.maximumf %5, %6 : vector<2x128xf32>
    %8 = arith.mulf %0, %7 : vector<2x128xf32>
    %c0_8 = arith.constant 0 : index
    %c0_9 = arith.constant 0 : index
    %c0_10 = arith.constant 0 : index
    %c0_11 = arith.constant 0 : index
    %c0_12 = arith.constant 0 : index
    %9 = vector.load %arg2[%c0_8, %c0_9, %c0_10, %c0_11, %c0_12] : memref<1x4x3x2x128xf32, #tpu.memory_space<vmem>>, vector<1x1x1x2x128xf32>
    %10 = vector.shape_cast %9 : vector<1x1x1x2x128xf32> to vector<2x128xf32>
    %11 = arith.mulf %8, %10 : vector<2x128xf32>
    %12 = arith.addf %1, %11 : vector<2x128xf32>
    %c0_13 = arith.constant 0 : index
    %c0_14 = arith.constant 0 : index
    %c1 = arith.constant 1 : index
    %c0_15 = arith.constant 0 : index
    %c0_16 = arith.constant 0 : index
    %13 = vector.load %arg2[%c0_13, %c0_14, %c1, %c0_15, %c0_16] : memref<1x4x3x2x128xf32, #tpu.memory_space<vmem>>, vector<1x1x1x2x128xf32>
    %14 = vector.shape_cast %13 : vector<1x1x1x2x128xf32> to vector<2x128xf32>
    %15 = arith.mulf %8, %14 : vector<2x128xf32>
    %16 = arith.addf %2, %15 : vector<2x128xf32>
    %c0_17 = arith.constant 0 : index
    %c0_18 = arith.constant 0 : index
    %c2 = arith.constant 2 : index
    %c0_19 = arith.constant 0 : index
    %c0_20 = arith.constant 0 : index
    %17 = vector.load %arg2[%c0_17, %c0_18, %c2, %c0_19, %c0_20] : memref<1x4x3x2x128xf32, #tpu.memory_space<vmem>>, vector<1x1x1x2x128xf32>
    %18 = vector.shape_cast %17 : vector<1x1x1x2x128xf32> to vector<2x128xf32>
    %19 = arith.mulf %8, %18 : vector<2x128xf32>
    %20 = arith.addf %3, %19 : vector<2x128xf32>
    %cst_21 = arith.constant 1.000000e+00 : f32
    %21 = vector.broadcast %cst_21 : f32 to vector<2x128xf32>
    %22 = arith.subf %21, %7 : vector<2x128xf32>
    %23 = arith.mulf %0, %22 : vector<2x128xf32>
    %c0_22 = arith.constant 0 : index
    %c1_23 = arith.constant 1 : index
    %c0_24 = arith.constant 0 : index
    %c0_25 = arith.constant 0 : index
    %c0_26 = arith.constant 0 : index
    %24 = vector.load %arg3[%c0_22, %c1_23, %c0_24, %c0_25, %c0_26] : memref<1x4x1x2x128xf32, #tpu.memory_space<vmem>>, vector<1x1x1x2x128xf32>
    %25 = vector.shape_cast %24 : vector<1x1x1x2x128xf32> to vector<2x128xf32>
    %cst_27 = arith.constant 9.99999974E-5 : f32
    %26 = vector.broadcast %cst_27 : f32 to vector<2x128xf32>
    %27 = arith.maximumf %25, %26 : vector<2x128xf32>
    %28 = arith.mulf %23, %27 : vector<2x128xf32>
    %c0_28 = arith.constant 0 : index
    %c1_29 = arith.constant 1 : index
    %c0_30 = arith.constant 0 : index
    %c0_31 = arith.constant 0 : index
    %c0_32 = arith.constant 0 : index
    %29 = vector.load %arg2[%c0_28, %c1_29, %c0_30, %c0_31, %c0_32] : memref<1x4x3x2x128xf32, #tpu.memory_space<vmem>>, vector<1x1x1x2x128xf32>
    %30 = vector.shape_cast %29 : vector<1x1x1x2x128xf32> to vector<2x128xf32>
    %31 = arith.mulf %28, %30 : vector<2x128xf32>
    %32 = arith.addf %12, %31 : vector<2x128xf32>
    %c0_33 = arith.constant 0 : index
    %c1_34 = arith.constant 1 : index
    %c1_35 = arith.constant 1 : index
    %c0_36 = arith.constant 0 : index
    %c0_37 = arith.constant 0 : index
    %33 = vector.load %arg2[%c0_33, %c1_34, %c1_35, %c0_36, %c0_37] : memref<1x4x3x2x128xf32, #tpu.memory_space<vmem>>, vector<1x1x1x2x128xf32>
    %34 = vector.shape_cast %33 : vector<1x1x1x2x128xf32> to vector<2x128xf32>
    %35 = arith.mulf %28, %34 : vector<2x128xf32>
    %36 = arith.addf %16, %35 : vector<2x128xf32>
    %c0_38 = arith.constant 0 : index
    %c1_39 = arith.constant 1 : index
    %c2_40 = arith.constant 2 : index
    %c0_41 = arith.constant 0 : index
    %c0_42 = arith.constant 0 : index
    %37 = vector.load %arg2[%c0_38, %c1_39, %c2_40, %c0_41, %c0_42] : memref<1x4x3x2x128xf32, #tpu.memory_space<vmem>>, vector<1x1x1x2x128xf32>
    %38 = vector.shape_cast %37 : vector<1x1x1x2x128xf32> to vector<2x128xf32>
    %39 = arith.mulf %28, %38 : vector<2x128xf32>
    %40 = arith.addf %20, %39 : vector<2x128xf32>
    %cst_43 = arith.constant 1.000000e+00 : f32
    %41 = vector.broadcast %cst_43 : f32 to vector<2x128xf32>
    %42 = arith.subf %41, %27 : vector<2x128xf32>
    %43 = arith.mulf %23, %42 : vector<2x128xf32>
    %c0_44 = arith.constant 0 : index
    %c2_45 = arith.constant 2 : index
    %c0_46 = arith.constant 0 : index
    %c0_47 = arith.constant 0 : index
    %c0_48 = arith.constant 0 : index
    %44 = vector.load %arg3[%c0_44, %c2_45, %c0_46, %c0_47, %c0_48] : memref<1x4x1x2x128xf32, #tpu.memory_space<vmem>>, vector<1x1x1x2x128xf32>
    %45 = vector.shape_cast %44 : vector<1x1x1x2x128xf32> to vector<2x128xf32>
    %cst_49 = arith.constant 9.99999974E-5 : f32
    %46 = vector.broadcast %cst_49 : f32 to vector<2x128xf32>
    %47 = arith.maximumf %45, %46 : vector<2x128xf32>
    %48 = arith.mulf %43, %47 : vector<2x128xf32>
    %c0_50 = arith.constant 0 : index
    %c2_51 = arith.constant 2 : index
    %c0_52 = arith.constant 0 : index
    %c0_53 = arith.constant 0 : index
    %c0_54 = arith.constant 0 : index
    %49 = vector.load %arg2[%c0_50, %c2_51, %c0_52, %c0_53, %c0_54] : memref<1x4x3x2x128xf32, #tpu.memory_space<vmem>>, vector<1x1x1x2x128xf32>
    %50 = vector.shape_cast %49 : vector<1x1x1x2x128xf32> to vector<2x128xf32>
    %51 = arith.mulf %48, %50 : vector<2x128xf32>
    %52 = arith.addf %32, %51 : vector<2x128xf32>
    %c0_55 = arith.constant 0 : index
    %c2_56 = arith.constant 2 : index
    %c1_57 = arith.constant 1 : index
    %c0_58 = arith.constant 0 : index
    %c0_59 = arith.constant 0 : index
    %53 = vector.load %arg2[%c0_55, %c2_56, %c1_57, %c0_58, %c0_59] : memref<1x4x3x2x128xf32, #tpu.memory_space<vmem>>, vector<1x1x1x2x128xf32>
    %54 = vector.shape_cast %53 : vector<1x1x1x2x128xf32> to vector<2x128xf32>
    %55 = arith.mulf %48, %54 : vector<2x128xf32>
    %56 = arith.addf %36, %55 : vector<2x128xf32>
    %c0_60 = arith.constant 0 : index
    %c2_61 = arith.constant 2 : index
    %c2_62 = arith.constant 2 : index
    %c0_63 = arith.constant 0 : index
    %c0_64 = arith.constant 0 : index
    %57 = vector.load %arg2[%c0_60, %c2_61, %c2_62, %c0_63, %c0_64] : memref<1x4x3x2x128xf32, #tpu.memory_space<vmem>>, vector<1x1x1x2x128xf32>
    %58 = vector.shape_cast %57 : vector<1x1x1x2x128xf32> to vector<2x128xf32>
    %59 = arith.mulf %48, %58 : vector<2x128xf32>
    %60 = arith.addf %40, %59 : vector<2x128xf32>
    %cst_65 = arith.constant 1.000000e+00 : f32
    %61 = vector.broadcast %cst_65 : f32 to vector<2x128xf32>
    %62 = arith.subf %61, %47 : vector<2x128xf32>
    %63 = arith.mulf %43, %62 : vector<2x128xf32>
    %c0_66 = arith.constant 0 : index
    %c3 = arith.constant 3 : index
    %c0_67 = arith.constant 0 : index
    %c0_68 = arith.constant 0 : index
    %c0_69 = arith.constant 0 : index
    %64 = vector.load %arg3[%c0_66, %c3, %c0_67, %c0_68, %c0_69] : memref<1x4x1x2x128xf32, #tpu.memory_space<vmem>>, vector<1x1x1x2x128xf32>
    %65 = vector.shape_cast %64 : vector<1x1x1x2x128xf32> to vector<2x128xf32>
    %cst_70 = arith.constant 9.99999974E-5 : f32
    %66 = vector.broadcast %cst_70 : f32 to vector<2x128xf32>
    %67 = arith.maximumf %65, %66 : vector<2x128xf32>
    %68 = arith.mulf %63, %67 : vector<2x128xf32>
    %c0_71 = arith.constant 0 : index
    %c3_72 = arith.constant 3 : index
    %c0_73 = arith.constant 0 : index
    %c0_74 = arith.constant 0 : index
    %c0_75 = arith.constant 0 : index
    %69 = vector.load %arg2[%c0_71, %c3_72, %c0_73, %c0_74, %c0_75] : memref<1x4x3x2x128xf32, #tpu.memory_space<vmem>>, vector<1x1x1x2x128xf32>
    %70 = vector.shape_cast %69 : vector<1x1x1x2x128xf32> to vector<2x128xf32>
    %71 = arith.mulf %68, %70 : vector<2x128xf32>
    %72 = arith.addf %52, %71 : vector<2x128xf32>
    %c0_76 = arith.constant 0 : index
    %c3_77 = arith.constant 3 : index
    %c1_78 = arith.constant 1 : index
    %c0_79 = arith.constant 0 : index
    %c0_80 = arith.constant 0 : index
    %73 = vector.load %arg2[%c0_76, %c3_77, %c1_78, %c0_79, %c0_80] : memref<1x4x3x2x128xf32, #tpu.memory_space<vmem>>, vector<1x1x1x2x128xf32>
    %74 = vector.shape_cast %73 : vector<1x1x1x2x128xf32> to vector<2x128xf32>
    %75 = arith.mulf %68, %74 : vector<2x128xf32>
    %76 = arith.addf %56, %75 : vector<2x128xf32>
    %c0_81 = arith.constant 0 : index
    %c3_82 = arith.constant 3 : index
    %c2_83 = arith.constant 2 : index
    %c0_84 = arith.constant 0 : index
    %c0_85 = arith.constant 0 : index
    %77 = vector.load %arg2[%c0_81, %c3_82, %c2_83, %c0_84, %c0_85] : memref<1x4x3x2x128xf32, #tpu.memory_space<vmem>>, vector<1x1x1x2x128xf32>
    %78 = vector.shape_cast %77 : vector<1x1x1x2x128xf32> to vector<2x128xf32>
    %79 = arith.mulf %68, %78 : vector<2x128xf32>
    %80 = arith.addf %60, %79 : vector<2x128xf32>
    %c0_86 = arith.constant 0 : index
    %c0_87 = arith.constant 0 : index
    %c0_88 = arith.constant 0 : index
    %c0_89 = arith.constant 0 : index
    %81 = vector.load %arg4[%c0_86, %c0_87, %c0_88, %c0_89] : memref<1x3x2x128xf32, #tpu.memory_space<vmem>>, vector<1x1x2x128xf32>
    %82 = vector.shape_cast %81 : vector<1x1x2x128xf32> to vector<2x128xf32>
    %83 = vector.shape_cast %72 : vector<2x128xf32> to vector<1x1x2x128xf32>
    tpu.vector_store %arg4[%c0_86, %c0_87, %c0_88, %c0_89], %83 {strides = array<i32>} : memref<1x3x2x128xf32, #tpu.memory_space<vmem>>, vector<1x1x2x128xf32>,
    %c0_90 = arith.constant 0 : index
    %c1_91 = arith.constant 1 : index
    %c0_92 = arith.constant 0 : index
    %c0_93 = arith.constant 0 : index
    %84 = vector.load %arg4[%c0_90, %c1_91, %c0_92, %c0_93] : memref<1x3x2x128xf32, #tpu.memory_space<vmem>>, vector<1x1x2x128xf32>
    %85 = vector.shape_cast %84 : vector<1x1x2x128xf32> to vector<2x128xf32>
    %86 = vector.shape_cast %76 : vector<2x128xf32> to vector<1x1x2x128xf32>
    tpu.vector_store %arg4[%c0_90, %c1_91, %c0_92, %c0_93], %86 {strides = array<i32>} : memref<1x3x2x128xf32, #tpu.memory_space<vmem>>, vector<1x1x2x128xf32>,
    %c0_94 = arith.constant 0 : index
    %c2_95 = arith.constant 2 : index
    %c0_96 = arith.constant 0 : index
    %c0_97 = arith.constant 0 : index
    %87 = vector.load %arg4[%c0_94, %c2_95, %c0_96, %c0_97] : memref<1x3x2x128xf32, #tpu.memory_space<vmem>>, vector<1x1x2x128xf32>
    %88 = vector.shape_cast %87 : vector<1x1x2x128xf32> to vector<2x128xf32>
    %89 = vector.shape_cast %80 : vector<2x128xf32> to vector<1x1x2x128xf32>
    tpu.vector_store %arg4[%c0_94, %c2_95, %c0_96, %c0_97], %89 {strides = array<i32>} : memref<1x3x2x128xf32, #tpu.memory_space<vmem>>, vector<1x1x2x128xf32>,
    return
  }
  func.func @transform_0(%arg0: i32, %arg1: i32) -> (i32, i32, i32, i32, i32) {
    %c0_i32 = arith.constant 0 : i32
    %c0_i32_0 = arith.constant 0 : i32
    %c0_i32_1 = arith.constant 0 : i32
    %c0_i32_2 = arith.constant 0 : i32
    return %arg0, %c0_i32, %c0_i32_0, %arg1, %c0_i32_1 : i32, i32, i32, i32, i32
  }
  func.func @transform_1(%arg0: i32, %arg1: i32) -> (i32, i32, i32, i32, i32) {
    %c0_i32 = arith.constant 0 : i32
    %c0_i32_0 = arith.constant 0 : i32
    %c0_i32_1 = arith.constant 0 : i32
    %c0_i32_2 = arith.constant 0 : i32
    return %arg0, %c0_i32, %c0_i32_0, %arg1, %c0_i32_1 : i32, i32, i32, i32, i32
  }
  func.func @transform_2(%arg0: i32, %arg1: i32) -> (i32, i32, i32, i32) {
    %c0_i32 = arith.constant 0 : i32
    %c0_i32_0 = arith.constant 0 : i32
    %c0_i32_1 = arith.constant 0 : i32
    return %arg0, %c0_i32, %arg1, %c0_i32_0 : i32, i32, i32, i32
  }
}

</mosaic_0001>

<llo_original>
// kernel: tpu_custom_call.1
$region0: #{tpu_custom_call.1}
  #allocation0 [shape = 'u32[]', space=smem, size = 0x4, offset = 0x4, fixed_abs, tag = 'smem constant byte address 0x4 - core index']
  #allocation1 [shape = 'u32[144,128]{1,0:T(1,128)}', space=vmem, size = 0x12000, scoped, tag = 'internal scratch']
  %s0 = inlined_call_operand.hbm [shape: f32[2,4,3,2,128], index: 0, kind: input, shape index: {}]
  %s1 = inlined_call_operand.hbm [shape: f32[2,4,1,2,128], index: 1, kind: input, shape index: {}]
  %s2 = inlined_call_operand.hbm [shape: f32[2,3,2,128], index: 2, kind: output, shape index: {}]
  %s3 = sld [smem:[#allocation0]]
  $region49: #{tpu_custom_call.1} parent=0
    _
  %s5 = ssub.s32 1, %s3
  %s6 = scalar_select 0, %s5, %s3
  $region1: #{tpu_custom_call.1} parent=0
    #allocation2 [shape = 'u8[24576]{0}', space=vmem, size = 0x6000, scoped, tag = 'input window, operand 0']
    #allocation3 [shape = 's32[2]{0}', space=sflag, size = 0x8, scoped, tag = 'scoped memory for tpu_custom_call.1']
    #allocation4 [shape = 's32[2]{0}', space=sflag, size = 0x8, scoped, tag = 'scoped memory for tpu_custom_call.1']
    #allocation5 [shape = 'u8[8192]{0}', space=vmem, size = 0x2000, scoped, tag = 'input window, operand 1']
    #allocation6 [shape = 's32[2]{0}', space=sflag, size = 0x8, scoped, tag = 'scoped memory for tpu_custom_call.1']
    #allocation7 [shape = 'u8[6144]{0}', space=vmem, size = 0x1800, scoped, tag = 'output window, operand 0']
    %7 = vsyncpa [#allocation3], 0
    %s8 = scalar_lea.sflag [#allocation3], 1
    %9 = vsyncpa %s8, 0
    %10 = vsyncpa [#allocation6], 0
    %s11 = scalar_lea.sflag [#allocation6], 1
    %12 = vsyncpa %s11, 0
    %13 = vsyncpa [#allocation4], 0
    %s14 = scalar_lea.sflag [#allocation4], 1
    %15 = vsyncpa %s14, 0
    loop: start=0, step=1, limit=4
    $region2: #{tpu_custom_call.1} parent=1 // loop_pre_header
      _
    $region3: #{tpu_custom_call.1} parent=1 // loop_header
      %s17 = sphi 0, %s21
      %p18 = scmp.ge.s32.totalorder %s17, 4
      %s24 = sphi 0, %s36
      %s25 = sphi 0, %s32
      %s26 = sphi 0, %s24
      %s27 = sphi 0, %s25
      %s28 = sphi 0, %s26
      %s29 = sphi 0, %s27
      %s41 = sphi 0, %s43
      %s44 = sphi 0, %s41
      %s45 = sphi 0, %s44
      %s61 = sphi 0, %s45
      %s69 = sphi 0, %s71
      %s72 = sphi 0, %s69
      %s73 = sphi 0, %s72
      %s89 = sphi 0, %s73
      %s97 = sphi 0, %s99
      %s100 = sphi 0, %s97
      %s101 = sphi 0, %s100
      %s117 = sphi 0, %s101
    $region4: #{tpu_custom_call.1} parent=1 // loop_header_branch
      %20 = sbr.rel (%p18) target = $region8
    $region5: #{tpu_custom_call.1} parent=1 // loop_body
      %s22 = ssub.s32 %s17, 1
      %s23 = ssub.s32 %s17, 2
      %s30 = sadd.s32 1, %s25
      %p31 = scmp.ge.s32.totalorder %s30, 1
      %s32 = scalar_select %p31, 0, %s30
      %s33 = sadd.s32 1, %s24
      %s34 = scalar_select %p31, %s33, %s24
      %p35 = scmp.ge.s32.totalorder %s34, 2
      %s36 = scalar_select %p35, 0, %s34
      %s37 = ssub.s32 %s24, %s36
      %s38 = ssub.s32 %s25, %s32
      %s39 = sor.u32 %s37, %s38
      %p40 = scmp.eq.s32.totalorder %s39, 0
      %s42 = sadd.s32 %s41, 1
      %s43 = scalar_select %p40, %s41, %s42
      %p46 = pneg %p40
      %p47 = scmp.eq.s32.totalorder %s17, 1
      %p48 = por %p46, %p47
      %p49 = scmp.ne.s32.totalorder %s41, %s44
      %p50 = scmp.eq.s32.totalorder %s17, 0
      %p51 = por %p49, %p50
      %p52 = scmp.ne.s32.totalorder %s41, %s44
      %p53 = scmp.eq.s32.totalorder %s22, 1
      %p54 = por %p52, %p53
      %p55 = scmp.ne.s32.totalorder %s44, %s45
      %p56 = scmp.eq.s32.totalorder %s22, 0
      %p57 = por %p55, %p56
      %p58 = scmp.ne.s32.totalorder %s44, %s45
      %p59 = scmp.eq.s32.totalorder %s23, 1
      %p60 = por %p58, %p59
      %p62 = scmp.ne.s32.totalorder %s45, %s61
      %p63 = scmp.eq.s32.totalorder %s23, 0
      %p64 = por %p62, %p63
      %s65 = ssub.s32 %s24, %s36
      %s66 = ssub.s32 %s25, %s32
      %s67 = sor.u32 %s65, %s66
      %p68 = scmp.eq.s32.totalorder %s67, 0
      %s70 = sadd.s32 %s69, 1
      %s71 = scalar_select %p68, %s69, %s70
      %p74 = pneg %p68
      %p75 = scmp.eq.s32.totalorder %s17, 1
      %p76 = por %p74, %p75
      %p77 = scmp.ne.s32.totalorder %s69, %s72
      %p78 = scmp.eq.s32.totalorder %s17, 0
      %p79 = por %p77, %p78
      %p80 = scmp.ne.s32.totalorder %s69, %s72
      %p81 = scmp.eq.s32.totalorder %s22, 1
      %p82 = por %p80, %p81
      %p83 = scmp.ne.s32.totalorder %s72, %s73
      %p84 = scmp.eq.s32.totalorder %s22, 0
      %p85 = por %p83, %p84
      %p86 = scmp.ne.s32.totalorder %s72, %s73
      %p87 = scmp.eq.s32.totalorder %s23, 1
      %p88 = por %p86, %p87
      %p90 = scmp.ne.s32.totalorder %s73, %s89
      %p91 = scmp.eq.s32.totalorder %s23, 0
      %p92 = por %p90, %p91
      %s93 = ssub.s32 %s24, %s36
      %s94 = ssub.s32 %s25, %s32
      %s95 = sor.u32 %s93, %s94
      %p96 = scmp.eq.s32.totalorder %s95, 0
      %s98 = sadd.s32 %s97, 1
      %s99 = scalar_select %p96, %s97, %s98
      %p102 = pneg %p96
      %p103 = scmp.eq.s32.totalorder %s17, 1
      %p104 = por %p102, %p103
      %p105 = scmp.ne.s32.totalorder %s97, %s100
      %p106 = scmp.eq.s32.totalorder %s17, 0
      %p107 = por %p105, %p106
      %p108 = scmp.ne.s32.totalorder %s97, %s100
      %p109 = scmp.eq.s32.totalorder %s22, 1
      %p110 = por %p108, %p109
      %p111 = scmp.ne.s32.totalorder %s100, %s101
      %p112 = scmp.eq.s32.totalorder %s22, 0
      %p113 = por %p111, %p112
      %p114 = scmp.ne.s32.totalorder %s100, %s101
      %p115 = scmp.eq.s32.totalorder %s23, 1
      %p116 = por %p114, %p115
      %p118 = scmp.ne.s32.totalorder %s101, %s117
      %p119 = scmp.eq.s32.totalorder %s23, 0
      %p120 = por %p118, %p119
      %p121 = scmp.le.s32.totalorder 1, %s17
      %p122 = scmp.lt.s32.totalorder %s17, 3
      %p123 = pnand %p121, %p122
      %p124 = pneg %p123
      // Predicated region
      $region9: #{tpu_custom_call.1} parent=5 // pred_check
        _
      $region10: #{tpu_custom_call.1} parent=5 // pred_check_branch
        %126 = sbr.rel (%p123) target = $region12
      $region11: #{tpu_custom_call.1} parent=5 // pred_region
        %s127 = ssub.s32 %s17, 1
      $region12: #{tpu_custom_call.1} parent=5 // pred_fallthru
        _
      %p128 = scmp.lt.s32.totalorder %s17, 2
      // Predicated region
      $region13: #{tpu_custom_call.1} parent=5 // pred_check
        %p129 = pneg %p128
      $region14: #{tpu_custom_call.1} parent=5 // pred_check_branch
        %131 = sbr.rel (%p129) target = $region16
      $region15: #{tpu_custom_call.1} parent=5 // pred_region
        // Predicated region
        $region17: #{tpu_custom_call.1} parent=15 // pred_check
          %p132 = pneg %p51
        $region18: #{tpu_custom_call.1} parent=15 // pred_check_branch
          %134 = sbr.rel (%p132) target = $region20
        $region19: #{tpu_custom_call.1} parent=15 // pred_region
          %s135 = sand.u32 %s41, 1
          %s136 = scalar_lea.sflag [#allocation3], %s135
          %s137 = sand.u32 %s41, 1
          %s138 = smul.addr %s137, 24
          %s139 = scalar_lea.vmem [#allocation2], %s138
          %s141 = ssub.s32 384, 384
          %142 = vsyncadd %s136, %s141
          %s143 = smul.addr %s24, 12
          %s144 = sadd.s32 %s25, %s143
          %s145 = smul.addr %s144, 32
          %s146 = scalar_lea.hbm %s0, %s145
          %s147 = sshll.u32 %s139, 4
          %s148 = int_to_ptr.vmem [resolvable:$true] %s147
          %153 = dma.hbm_to_vmem [thread:$0]  %s146, 384, %s148, %s136, 32, 32, 2
        $region20: #{tpu_custom_call.1} parent=15 // pred_fallthru
          _
        // Predicated region
        $region21: #{tpu_custom_call.1} parent=15 // pred_check
          %p154 = pneg %p79
        $region22: #{tpu_custom_call.1} parent=15 // pred_check_branch
          %156 = sbr.rel (%p154) target = $region24
        $region23: #{tpu_custom_call.1} parent=15 // pred_region
          %s157 = sand.u32 %s69, 1
          %s158 = scalar_lea.sflag [#allocation6], %s157
          %s159 = sand.u32 %s69, 1
          %s160 = smul.addr %s159, 8
          %s161 = scalar_lea.vmem [#allocation5], %s160
          %s163 = ssub.s32 128, 128
          %164 = vsyncadd %s158, %s163
          %s165 = smul.addr %s24, 4
          %s166 = sadd.s32 %s25, %s165
          %s167 = smul.addr %s166, 32
          %s168 = scalar_lea.hbm %s1, %s167
          %s169 = sshll.u32 %s161, 4
          %s170 = int_to_ptr.vmem [resolvable:$true] %s169
          %175 = dma.hbm_to_vmem [thread:$0]  %s168, 128, %s170, %s158, 32, 32, 2
        $region24: #{tpu_custom_call.1} parent=15 // pred_fallthru
          _
      $region16: #{tpu_custom_call.1} parent=5 // pred_fallthru
        _
      %p176 = scmp.le.s32.totalorder 1, %s17
      %p177 = scmp.lt.s32.totalorder %s17, 3
      %p178 = pnand %p176, %p177
      %p179 = pneg %p178
      // Predicated region
      $region25: #{tpu_custom_call.1} parent=5 // pred_check
        _
      $region26: #{tpu_custom_call.1} parent=5 // pred_check_branch
        %181 = sbr.rel (%p178) target = $region28
      $region27: #{tpu_custom_call.1} parent=5 // pred_region
        %s182 = ssub.s32 %s17, 1
        %s183 = sand.u32 %s44, 1
        %s184 = scalar_lea.sflag [#allocation3], %s183
        %s185 = sand.u32 %s44, 1
        %s186 = smul.addr %s185, 24
        %s187 = scalar_lea.vmem [#allocation2], %s186
        // Predicated region
        $region29: #{tpu_custom_call.1} parent=27 // pred_check
          %p188 = pneg %p57
        $region30: #{tpu_custom_call.1} parent=27 // pred_check_branch
          %190 = sbr.rel (%p188) target = $region32
        $region31: #{tpu_custom_call.1} parent=27 // pred_region
          %191 = dma.done %s184, 384
        $region32: #{tpu_custom_call.1} parent=27 // pred_fallthru
          _
        %s192 = sand.u32 %s72, 1
        %s193 = scalar_lea.sflag [#allocation6], %s192
        %s194 = sand.u32 %s72, 1
        %s195 = smul.addr %s194, 8
        %s196 = scalar_lea.vmem [#allocation5], %s195
        // Predicated region
        $region33: #{tpu_custom_call.1} parent=27 // pred_check
          %p197 = pneg %p85
        $region34: #{tpu_custom_call.1} parent=27 // pred_check_branch
          %199 = sbr.rel (%p197) target = $region36
        $region35: #{tpu_custom_call.1} parent=27 // pred_region
          %200 = dma.done %s193, 128
        $region36: #{tpu_custom_call.1} parent=27 // pred_fallthru
          _
        %s201 = sand.u32 %s44, 1
        %s202 = scalar_lea.sflag [#allocation3], %s201
        %s203 = sand.u32 %s44, 1
        %s204 = smul.addr %s203, 24
        %s205 = scalar_lea.vmem [#allocation2], %s204
        %p206 = pneg %p57
        %p207 = pneg %p54
        %s208 = sand.u32 %s72, 1
        %s209 = scalar_lea.sflag [#allocation6], %s208
        %s210 = sand.u32 %s72, 1
        %s211 = smul.addr %s210, 8
        %s212 = scalar_lea.vmem [#allocation5], %s211
        %p213 = pneg %p85
        %p214 = pneg %p82
        %p215 = pneg %p113
        %p216 = pneg %p110
        %s217 = sand.u32 %s100, 1
        %s218 = scalar_lea.sflag [#allocation4], %s217
        %s219 = sand.u32 %s100, 1
        %s220 = smul.addr %s219, 6
        %s221 = scalar_lea.vmem [#allocation7], %s220
        %v222 = vld [vmem:[%s196] sm:$0x3]
        %v223 = vmax.f32 %v222, 0.0001
        %v224 = vld [vmem:[%s187] sm:$0x3]
        %v225 = vmul.f32 %v223, %v224
        %v226 = vadd.f32 %v225, 0.0
        %s227 = scalar_lea.vmem %s187, 2 [#allocation2]
        %v228 = vld [vmem:[%s227] sm:$0x3]
        %v229 = vmul.f32 %v223, %v228
        %v230 = vadd.f32 %v229, 0.0
        %s231 = scalar_lea.vmem %s187, 4 [#allocation2]
        %v232 = vld [vmem:[%s231] sm:$0x3]
        %v233 = vmul.f32 %v223, %v232
        %v234 = vadd.f32 %v233, 0.0
        %v235 = vsub.f32 1.0, %v223
        %s236 = scalar_lea.vmem %s196, 2 [#allocation5]
        %v237 = vld [vmem:[%s236] sm:$0x3]
        %v238 = vmax.f32 %v237, 0.0001
        %v239 = vmul.f32 %v235, %v238
        %s240 = scalar_lea.vmem %s187, 6 [#allocation2]
        %v241 = vld [vmem:[%s240] sm:$0x3]
        %v242 = vmul.f32 %v239, %v241
        %v243 = vadd.f32 %v226, %v242
        %s244 = scalar_lea.vmem %s187, 8 [#allocation2]
        %v245 = vld [vmem:[%s244] sm:$0x3]
        %v246 = vmul.f32 %v239, %v245
        %v247 = vadd.f32 %v230, %v246
        %s248 = scalar_lea.vmem %s187, 10 [#allocation2]
        %v249 = vld [vmem:[%s248] sm:$0x3]
        %v250 = vmul.f32 %v239, %v249
        %v251 = vadd.f32 %v234, %v250
        %v252 = vsub.f32 1.0, %v238
        %v253 = vmul.f32 %v235, %v252
        %s254 = scalar_lea.vmem %s196, 4 [#allocation5]
        %v255 = vld [vmem:[%s254] sm:$0x3]
        %v256 = vmax.f32 %v255, 0.0001
        %v257 = vmul.f32 %v253, %v256
        %s258 = scalar_lea.vmem %s187, 12 [#allocation2]
        %v259 = vld [vmem:[%s258] sm:$0x3]
        %v260 = vmul.f32 %v257, %v259
        %v261 = vadd.f32 %v243, %v260
        %s262 = scalar_lea.vmem %s187, 14 [#allocation2]
        %v263 = vld [vmem:[%s262] sm:$0x3]
        %v264 = vmul.f32 %v257, %v263
        %v265 = vadd.f32 %v247, %v264
        %s266 = scalar_lea.vmem %s187, 16 [#allocation2]
        %v267 = vld [vmem:[%s266] sm:$0x3]
        %v268 = vmul.f32 %v257, %v267
        %v269 = vadd.f32 %v251, %v268
        %v270 = vsub.f32 1.0, %v256
        %v271 = vmul.f32 %v253, %v270
        %s272 = scalar_lea.vmem %s196, 6 [#allocation5]
        %v273 = vld [vmem:[%s272] sm:$0x3]
        %v274 = vmax.f32 %v273, 0.0001
        %v275 = vmul.f32 %v271, %v274
        %s276 = scalar_lea.vmem %s187, 18 [#allocation2]
        %v277 = vld [vmem:[%s276] sm:$0x3]
        %v278 = vmul.f32 %v275, %v277
        %v279 = vadd.f32 %v261, %v278
        %s280 = scalar_lea.vmem %s187, 20 [#allocation2]
        %v281 = vld [vmem:[%s280] sm:$0x3]
        %v282 = vmul.f32 %v275, %v281
        %v283 = vadd.f32 %v265, %v282
        %s284 = scalar_lea.vmem %s187, 22 [#allocation2]
        %v285 = vld [vmem:[%s284] sm:$0x3]
        %v286 = vmul.f32 %v275, %v285
        %v287 = vadd.f32 %v269, %v286
        %288 = vst [vmem:[%s221] sm:$0x3] %v279
        %s289 = scalar_lea.vmem %s221, 2 [#allocation7]
        %290 = vst [vmem:[%s289] sm:$0x3] %v283
        %s291 = scalar_lea.vmem %s221, 4 [#allocation7]
        %292 = vst [vmem:[%s291] sm:$0x3] %v287
        %s293 = sand.u32 %s100, 1
        %s294 = scalar_lea.sflag [#allocation4], %s293
        %s295 = sand.u32 %s100, 1
        %s296 = smul.addr %s295, 6
        %s297 = scalar_lea.vmem [#allocation7], %s296
        // Predicated region
        $region37: #{tpu_custom_call.1} parent=27 // pred_check
          %p298 = pneg %p110
        $region38: #{tpu_custom_call.1} parent=27 // pred_check_branch
          %300 = sbr.rel (%p298) target = $region40
        $region39: #{tpu_custom_call.1} parent=27 // pred_region
          %s302 = ssub.s32 96, 96
          %303 = vsyncadd %s294, %s302
          %s304 = smul.addr %s26, 3
          %s305 = sadd.s32 %s27, %s304
          %s306 = smul.addr %s305, 32
          %s307 = scalar_lea.hbm %s2, %s306
          %s308 = sshll.u32 %s297, 4
          %s309 = int_to_ptr.vmem [resolvable:$true] %s308
          %314 = dma.vmem_to_hbm [thread:$0]  %s309, 96, %s307, %s294, 32, 32, 2
        $region40: #{tpu_custom_call.1} parent=27 // pred_fallthru
          _
      $region28: #{tpu_custom_call.1} parent=5 // pred_fallthru
        _
      %p315 = scmp.le.s32.totalorder 2, %s17
      // Predicated region
      $region41: #{tpu_custom_call.1} parent=5 // pred_check
        %p316 = pneg %p315
      $region42: #{tpu_custom_call.1} parent=5 // pred_check_branch
        %318 = sbr.rel (%p316) target = $region44
      $region43: #{tpu_custom_call.1} parent=5 // pred_region
        %s319 = ssub.s32 %s17, 2
        // Predicated region
        $region45: #{tpu_custom_call.1} parent=43 // pred_check
          %p320 = pneg %p116
        $region46: #{tpu_custom_call.1} parent=43 // pred_check_branch
          %322 = sbr.rel (%p320) target = $region48
        $region47: #{tpu_custom_call.1} parent=43 // pred_region
          %s323 = sand.u32 %s101, 1
          %s324 = scalar_lea.sflag [#allocation4], %s323
          %s325 = sand.u32 %s101, 1
          %s326 = smul.addr %s325, 6
          %s327 = scalar_lea.vmem [#allocation7], %s326
          %328 = dma.done %s324, 96
        $region48: #{tpu_custom_call.1} parent=43 // pred_fallthru
          _
      $region44: #{tpu_custom_call.1} parent=5 // pred_fallthru
        _
    $region6: #{tpu_custom_call.1} parent=1 // loop_footer
      %s21 = sadd.s32 1, %s17
    $region7: #{tpu_custom_call.1} parent=1 // loop_footer_branch
      %16 = sbr.rel target = $region3
    $region8: #{tpu_custom_call.1} parent=1 // loop_exit
      _
    %329 = vsyncpa [#allocation3], 1
    %s330 = scalar_lea.sflag [#allocation3], 1
    %331 = vsyncpa %s330, 1
    %332 = vsyncpa [#allocation6], 1
    %s333 = scalar_lea.sflag [#allocation6], 1
    %334 = vsyncpa %s333, 1
    %335 = vsyncpa [#allocation4], 1
    %s336 = scalar_lea.sflag [#allocation4], 1
    %337 = vsyncpa %s336, 1

</llo_original>
